<compile_context>
chip_gen: v6e
topology: v6e:2x2x1
jax: 0.10.0
libtpu: 0.0.40
codegen_flags: <defaults>
</compile_context>

<pallas_src>
import functools

import jax
import jax.numpy as jnp
from jax import lax
from jax.experimental import pallas as pl
from jax.experimental.pallas import tpu as pltpu


def _round_up(a, m):
    return ((a + m - 1) // m) * m


# ----------------------------------------------------------------------------
# Hardware-aware sizing helpers.
# ----------------------------------------------------------------------------
def _vmem_limit_bytes():
    """Generation-aware VMEM budget (headroom left for Mosaic internal scratch)."""
    try:
        cap = int(pltpu.get_tpu_info().vmem_capacity_bytes)
    except Exception:
        cap = 64 * 1024 * 1024                 # conservative default (v7x per-TC)
    cap = max(cap, 32 * 1024 * 1024)
    limit = min(cap - 24 * 1024 * 1024, int(cap * 0.72))
    return int(max(limit, 24 * 1024 * 1024))   # ~40 MiB on 64 MiB parts, ~92 MiB on 128 MiB


def _single_tensorcore_chip():
    """True for 1-TensorCore-per-device chips (v2/v3 cores, v5e, v6e)."""
    try:
        kind = jax.devices()[0].device_kind.lower()
    except Exception:
        return False
    if "v7" in kind or "v4" in kind or "v5p" in kind:
        return False
    for tag in ("v2", "v3", "v5e", "v5 lite", "v5lite", "v6e", "v6 lite", "v6lite"):
        if tag in kind:
            return True
    return False


def _maybe_single_buffered(block_shape, index_map):
    """BlockSpec with single buffering (for weights whose block never changes per core)."""
    buffered = getattr(pl, "Buffered", None)
    if buffered is not None:
        try:
            return pl.BlockSpec(block_shape, index_map, pipeline_mode=buffered(1))
        except TypeError:
            pass
    return pl.BlockSpec(block_shape, index_map)


# ----------------------------------------------------------------------------
# Kernel 1: hoisted input projection  gx = sum_k x_k @ W_k   (stored bf16)
# ----------------------------------------------------------------------------
def _proj_kernel(*refs):
    # refs = (x_0, w_0[, x_1, w_1], out_ref)
    out_ref = refs[-1]
    acc = jnp.dot(refs[0][...], refs[1][...], preferred_element_type=jnp.float32)
    for k in range(1, (len(refs) - 1) // 2):
        acc = acc + jnp.dot(refs[2 * k][...], refs[2 * k + 1][...],
                            preferred_element_type=jnp.float32)
    out_ref[...] = acc.astype(out_ref.dtype)


def _input_projection(xs, ws, *, vmem_limit):
    """xs[k]:(M, Din_k) bf16, ws[k]:(Din_k, N) bf16 -> (M, N) bf16."""
    M = xs[0].shape[0]
    N = ws[0].shape[1]
    din_total = sum(int(w.shape[0]) for w in ws)
    budget = int(vmem_limit * 0.8)

    w_bytes = 2 * din_total * N                    # one bf16 copy of all W
    if 2 * w_bytes <= budget // 2:                 # resident W (DMA'd exactly once)
        tn = N
    else:
        tn = 2048
        while tn > 128 and 4 * din_total * tn > budget // 2:
            tn //= 2
    grid_n = pl.cdiv(N, tn)

    w_blk = 4 * din_total * tn                     # double-buffered bf16 W block(s)
    per_row = 4 * din_total + 4 * tn               # 2-buf bf16 x row + 2-buf bf16 out row
    tm = (budget - w_blk) // per_row
    tm = int(max(8, min(tm, M, 8192)))
    tm -= tm % 8
    grid_m = pl.cdiv(M, tm)

    in_specs, args = [], []
    for x, w in zip(xs, ws):
        din = int(x.shape[1])
        in_specs.append(pl.BlockSpec((tm, din), lambda n, m: (m, 0)))
        in_specs.append(pl.BlockSpec((int(w.shape[0]), tn), lambda n, m: (0, n)))
        args += [x, w]

    return pl.pallas_call(
        _proj_kernel,
        out_shape=jax.ShapeDtypeStruct((M, N), jnp.bfloat16),
        grid_spec=pltpu.PrefetchScalarGridSpec(
            num_scalar_prefetch=0,
            grid=(grid_n, grid_m),                 # N outer -> each W block fetched once
            in_specs=in_specs,
            out_specs=pl.BlockSpec((tm, tn), lambda n, m: (m, n)),
        ),
        compiler_params=pltpu.CompilerParams(
            dimension_semantics=("parallel", "parallel"),
            vmem_limit_bytes=vmem_limit,
        ),
    )(*args)


# ----------------------------------------------------------------------------
# Shared LSTM cell step (operates on refs; h scratch is bf16, c scratch f32).
# ----------------------------------------------------------------------------
def _cell_step(gx_ref, whh_ref, bias, lens, h_sc, c_sc, out_ref, lt, t, HP):
    gates = (jnp.dot(h_sc[...], whh_ref[...], preferred_element_type=jnp.float32)
             + gx_ref[lt].astype(jnp.float32) + bias)
    i_g = jax.nn.sigmoid(gates[:, 0 * HP:1 * HP])
    f_g = jax.nn.sigmoid(gates[:, 1 * HP:2 * HP])
    g_g = jnp.tanh(gates[:, 2 * HP:3 * HP])
    o_g = jax.nn.sigmoid(gates[:, 3 * HP:4 * HP])
    c_new = f_g * c_sc[...] + i_g * g_g
    h_new = o_g * jnp.tanh(c_new)
    keep = t < lens                                      # (B,1) bool
    c_sc[...] = jnp.where(keep, c_new, c_sc[...])
    h_sc[...] = jnp.where(keep, h_new.astype(jnp.bfloat16), h_sc[...])
    out_ref[lt] = jnp.where(keep, h_new, 0.0).astype(out_ref.dtype)   # exact zero past len


# ----------------------------------------------------------------------------
# Kernel 2a ("split"): grid = (2 directions, time tiles).  2-TC chips (v7x).
# ----------------------------------------------------------------------------
def _lstm_kernel_split(len_ref, gx_ref, whh_ref, b_ref, out_ref, h_sc, c_sc,
                       *, TT, HP, nT):
    d = pl.program_id(0)          # 0 = forward, 1 = backward
    tq = pl.program_id(1)

    @pl.when(tq == 0)
    def _():
        h_sc[...] = jnp.zeros_like(h_sc)
        c_sc[...] = jnp.zeros_like(c_sc)

    t_base = (tq + d * (nT - 1 - 2 * tq)) * TT
    lens = len_ref[...]
    bias = b_ref[...]             # (1, 4HP) f32

    def step(i, carry):
        lt = i + d * (TT - 1 - 2 * i)      # reverse direction walks the tile backwards
        _cell_step(gx_ref, whh_ref, bias, lens, h_sc, c_sc, out_ref, lt, t_base + lt, HP)
        return carry

    lax.fori_loop(0, TT, step, 0, unroll=4)


def _recurrence_split(gx, whh_cat, b3, lens2d, *, TT, HP, out_dtype, vmem_limit):
    T_pad, B_pad, _ = gx.shape
    nT = T_pad // TT
    kernel = functools.partial(_lstm_kernel_split, TT=TT, HP=HP, nT=nT)
    return pl.pallas_call(
        kernel,
        out_shape=jax.ShapeDtypeStruct((T_pad, B_pad, 2 * HP), out_dtype),
        grid_spec=pltpu.PrefetchScalarGridSpec(
            num_scalar_prefetch=0,
            grid=(2, nT),
            in_specs=[
                pl.BlockSpec((B_pad, 1), lambda d, t: (0, 0)),
                pl.BlockSpec((TT, B_pad, 4 * HP),
                             lambda d, t: (t + d * (nT - 1 - 2 * t), 0, d)),
                _maybe_single_buffered((None, HP, 4 * HP), lambda d, t: (d, 0, 0)),
                pl.BlockSpec((None, 1, 4 * HP), lambda d, t: (d, 0, 0)),
            ],
            out_specs=pl.BlockSpec((TT, B_pad, HP),
                                   lambda d, t: (t + d * (nT - 1 - 2 * t), 0, d)),
            scratch_shapes=[
                pltpu.VMEM((B_pad, HP), jnp.bfloat16),   # h (bf16: feeds MXU directly)
                pltpu.VMEM((B_pad, HP), jnp.float32),    # c
            ],
        ),
        compiler_params=pltpu.CompilerParams(
            dimension_semantics=("parallel", "arbitrary"),
            vmem_limit_bytes=vmem_limit,
        ),
    )(lens2d, gx, whh_cat, b3)


# ----------------------------------------------------------------------------
# Kernel 2b ("fused"): grid = (time tiles,), both directions per grid step.
# Two independent recurrence chains interleave -> hides per-step latency on
# single-TensorCore chips (v5e / v6e).
# ----------------------------------------------------------------------------
def _lstm_kernel_fused(len_ref, gxf_ref, gxb_ref, whhf_ref, whhb_ref, b_ref,
                       outf_ref, outb_ref, hf_sc, cf_sc, hb_sc, cb_sc,
                       *, TT, HP, nT):
    tq = pl.program_id(0)

    @pl.when(tq == 0)
    def _():
        hf_sc[...] = jnp.zeros_like(hf_sc)
        cf_sc[...] = jnp.zeros_like(cf_sc)
        hb_sc[...] = jnp.zeros_like(hb_sc)
        cb_sc[...] = jnp.zeros_like(cb_sc)

    lens = len_ref[...]
    bias_f = b_ref[0]             # (1, 4HP) f32
    bias_b = b_ref[1]
    tf_base = tq * TT
    tb_base = (nT - 1 - tq) * TT

    def step(i, carry):
        # forward chain: local step i of time tile tq
        _cell_step(gxf_ref, whhf_ref, bias_f, lens, hf_sc, cf_sc, outf_ref,
                   i, tf_base + i, HP)
        # backward chain: local step TT-1-i of time tile nT-1-tq
        lt_b = TT - 1 - i
        _cell_step(gxb_ref, whhb_ref, bias_b, lens, hb_sc, cb_sc, outb_ref,
                   lt_b, tb_base + lt_b, HP)
        return carry

    lax.fori_loop(0, TT, step, 0, unroll=2)


def _recurrence_fused(gx, whh_cat, b3, lens2d, *, TT, HP, out_dtype, vmem_limit):
    T_pad, B_pad, _ = gx.shape
    nT = T_pad // TT
    kernel = functools.partial(_lstm_kernel_fused, TT=TT, HP=HP, nT=nT)
    out_sds = jax.ShapeDtypeStruct((T_pad, B_pad, HP), out_dtype)
    return pl.pallas_call(
        kernel,
        out_shape=(out_sds, out_sds),
        grid_spec=pltpu.PrefetchScalarGridSpec(
            num_scalar_prefetch=0,
            grid=(nT,),
            in_specs=[
                pl.BlockSpec((B_pad, 1), lambda t: (0, 0)),
                pl.BlockSpec((TT, B_pad, 4 * HP), lambda t: (t, 0, 0)),           # fwd gates
                pl.BlockSpec((TT, B_pad, 4 * HP), lambda t: (nT - 1 - t, 0, 1)),  # bwd gates
                _maybe_single_buffered((None, HP, 4 * HP), lambda t: (0, 0, 0)),
                _maybe_single_buffered((None, HP, 4 * HP), lambda t: (1, 0, 0)),
                pl.BlockSpec((2, 1, 4 * HP), lambda t: (0, 0, 0)),
            ],
            out_specs=[
                pl.BlockSpec((TT, B_pad, HP), lambda t: (t, 0, 0)),
                pl.BlockSpec((TT, B_pad, HP), lambda t: (nT - 1 - t, 0, 0)),
            ],
            scratch_shapes=[
                pltpu.VMEM((B_pad, HP), jnp.bfloat16),   # h fwd
                pltpu.VMEM((B_pad, HP), jnp.float32),    # c fwd
                pltpu.VMEM((B_pad, HP), jnp.bfloat16),   # h bwd
                pltpu.VMEM((B_pad, HP), jnp.float32),    # c bwd
            ],
        ),
        compiler_params=pltpu.CompilerParams(
            dimension_semantics=("arbitrary",),
            vmem_limit_bytes=vmem_limit,
        ),
    )(lens2d, gx, gx, whh_cat, whh_cat, b3)


# ----------------------------------------------------------------------------
# Weight preparation (torch layout -> padded, pre-transposed, pre-cast; once).
# ----------------------------------------------------------------------------
def _pad_gate_cols(w, H, HP):
    parts = []
    for g in range(4):
        parts.append(jnp.pad(w[:, g * H:(g + 1) * H], ((0, 0), (0, HP - H))))
    return jnp.concatenate(parts, axis=1)


def _prepare_params(params, H, HP):
    prepared = []
    for l, layer in enumerate(params):
        w_ih_dirs, b_dirs, whh_dirs = [], [], []
        for (w_ih, w_hh, b_ih, b_hh) in layer:
            wi = _pad_gate_cols(jnp.transpose(w_ih).astype(jnp.float32), H, HP)
            if l > 0:
                # previous layer output lanes: [fwd 0:H | pad | bwd HP:HP+H | pad]
                full = jnp.zeros((2 * HP, 4 * HP), jnp.float32)
                full = full.at[:H].set(wi[:H])
                full = full.at[HP:HP + H].set(wi[H:2 * H])
                wi = full
            w_ih_dirs.append(wi)
            wh = _pad_gate_cols(jnp.transpose(w_hh).astype(jnp.float32), H, HP)
            whh_dirs.append(jnp.pad(wh, ((0, HP - H), (0, 0))))
            b_dirs.append(_pad_gate_cols(
                (b_ih + b_hh).reshape(1, -1).astype(jnp.float32), H, HP))
        prepared.append((
            jnp.concatenate(w_ih_dirs, axis=1).astype(jnp.bfloat16),  # (Din_eff, 8HP)
            jnp.stack(b_dirs, axis=0),                                # (2, 1, 4HP) f32
            jnp.stack(whh_dirs, axis=0).astype(jnp.bfloat16),         # (2, HP, 4HP)
        ))
    return prepared


def _choose_time_tile(T, B_pad, HP, *, ndir, vmem_limit):
    budget = int(vmem_limit * 0.6)
    fixed = ndir * (8 * HP * HP + 6 * B_pad * HP) + 256 * 1024
    per_step = ndir * 24 * B_pad * HP     # 2-buf bf16 gates + 2-buf (<=f32) output per step
    tt = (budget - fixed) // per_step
    tt = int(max(8, min(tt, 128)))
    return int(min(tt, _round_up(T, 8)))


# ----------------------------------------------------------------------------
# Module wrapper:  biLSTM.forward(x, len)
# ----------------------------------------------------------------------------
def bilstm_forward(x, lengths, params, force_mode=None):
    """x:(B,T,insize), lengths:(B,) int, params[layer][dir]=(w_ih,w_hh,b_ih,b_hh).
       force_mode: None (auto by chip), "fused" (both directions per grid step,
       for 1-TC chips) or "split" (direction axis parallel across 2 TCs).
       Returns (B, T, 2H) f32 with exact zeros past each length."""
    B, T, _ = x.shape
    H = params[0][0][1].shape[1]                      # w_hh is (4H, H)
    HP = _round_up(H, 128)
    B_pad = _round_up(B, 8)
    vmem_limit = _vmem_limit_bytes()
    fused = _single_tensorcore_chip() if force_mode is None else (force_mode == "fused")
    TT = _choose_time_tile(T, B_pad, HP, ndir=2 if fused else 1, vmem_limit=vmem_limit)
    T_pad = _round_up(T, TT)
    M = T_pad * B_pad
    n_layers = len(params)

    prepared = _prepare_params(params, H, HP)

    # cast to bf16 before the transpose/pad: no f32 copy of the input in HBM
    xt = jnp.transpose(x.astype(jnp.bfloat16), (1, 0, 2))         # (T, B, Din)
    xt = jnp.pad(xt, ((0, T_pad - T), (0, B_pad - B), (0, 0)))
    lens2d = jnp.pad(lengths.astype(jnp.int32), (0, B_pad - B)).reshape(B_pad, 1)

    if fused:
        cur_f = cur_b = None
        for li, (w_cat, b3, whh) in enumerate(prepared):
            out_dtype = jnp.float32 if li == n_layers - 1 else jnp.bfloat16
            if li == 0:
                xs, ws = [xt.reshape(M, -1)], [w_cat]
            else:
                xs = [cur_f.reshape(M, HP), cur_b.reshape(M, HP)]
                ws = [w_cat[:HP], w_cat[HP:]]
            gx = _input_projection(xs, ws, vmem_limit=vmem_limit)
            gx = gx.reshape(T_pad, B_pad, 8 * HP)
            cur_f, cur_b = _recurrence_fused(gx, whh, b3, lens2d, TT=TT, HP=HP,
                                             out_dtype=out_dtype, vmem_limit=vmem_limit)
        y = jnp.concatenate([cur_f[..., :H], cur_b[..., :H]], axis=-1)
    else:
        cur = xt                                                   # (T_pad, B_pad, Din)
        for li, (w_cat, b3, whh) in enumerate(prepared):
            out_dtype = jnp.float32 if li == n_layers - 1 else jnp.bfloat16
            gx = _input_projection([cur.reshape(M, cur.shape[-1])], [w_cat],
                                   vmem_limit=vmem_limit)
            gx = gx.reshape(T_pad, B_pad, 8 * HP)
            cur = _recurrence_split(gx, whh, b3, lens2d, TT=TT, HP=HP,
                                    out_dtype=out_dtype, vmem_limit=vmem_limit)
        y = jnp.concatenate([cur[..., :H], cur[..., HP:HP + H]], axis=-1)

    return jnp.transpose(y, (1, 0, 2))[:B, :T].astype(jnp.float32)   # (B, T, 2H)


# ----------------------------------------------------------------------------
# Pure-JAX reference (same math, no Pallas) for a correctness check.
# ----------------------------------------------------------------------------
def _ref_dir(xt, lengths, w_ih, w_hh, b, reverse):
    T, B, _ = xt.shape
    H = w_hh.shape[1]
    h = jnp.zeros((B, H), jnp.float32)
    c = jnp.zeros((B, H), jnp.float32)
    out = jnp.zeros((T, B, H), jnp.float32)
    order = range(T - 1, -1, -1) if reverse else range(T)
    for t in order:
        gates = xt[t] @ w_ih.T + h @ w_hh.T + b
        i_g = jax.nn.sigmoid(gates[:, :H])
        f_g = jax.nn.sigmoid(gates[:, H:2 * H])
        g_g = jnp.tanh(gates[:, 2 * H:3 * H])
        o_g = jax.nn.sigmoid(gates[:, 3 * H:4 * H])
        c_new = f_g * c + i_g * g_g
        h_new = o_g * jnp.tanh(c_new)
        m = (t < lengths).astype(jnp.float32)[:, None]
        c = m * c_new + (1.0 - m) * c
        h = m * h_new + (1.0 - m) * h
        out = out.at[t].set(m * h_new)
    return out


def _ref_forward(x, lengths, params):
    xt = jnp.transpose(x, (1, 0, 2)).astype(jnp.float32)
    for layer in params:
        outs = []
        for d, (w_ih, w_hh, b_ih, b_hh) in enumerate(layer):
            outs.append(_ref_dir(xt, lengths, w_ih, w_hh, b_ih + b_hh, d == 1))
        xt = jnp.concatenate(outs, axis=-1)
    return jnp.transpose(xt, (1, 0, 2))


# ----------------------------------------------------------------------------
# Deterministic parameter init (nn.LSTM shapes: W_ih (4H,Din), W_hh (4H,H)).
# ----------------------------------------------------------------------------
def init_bilstm_params(key, hisize, layers, insize):
    params = []
    scale = 1.0 / jnp.sqrt(hisize)
    for l in range(layers):
        d_in = insize if l == 0 else 2 * hisize
        layer = []
        for _ in range(2):  # forward, backward
            key, k1, k2, k3, k4 = jax.random.split(key, 5)
            w_ih = jax.random.uniform(k1, (4 * hisize, d_in), jnp.float32, -scale, scale)
            w_hh = jax.random.uniform(k2, (4 * hisize, hisize), jnp.float32, -scale, scale)
            b_ih = jax.random.uniform(k3, (4 * hisize,), jnp.float32, -scale, scale)
            b_hh = jax.random.uniform(k4, (4 * hisize,), jnp.float32, -scale, scale)
            layer.append((w_ih, w_hh, b_ih, b_hh))
        params.append(layer)
    return params


if __name__ == "__main__":
    # small shapes consistent with the module: batch=2, seq=8, insize=32, hidden=32, 2 layers
    B, T, INSIZE, HISIZE, LAYERS = 2, 8, 32, 32, 2

    key = jax.random.PRNGKey(0)
    key, kx = jax.random.split(key)
    x = jax.random.normal(kx, (B, T, INSIZE), jnp.float32)
    lengths = jnp.array([8, 5], jnp.int32)          # variable sequence lengths
    params = init_bilstm_params(key, HISIZE, LAYERS, INSIZE)

    t_max = int(jnp.max(lengths))                   # pad_packed_sequence trims to max(len)
    y_ref = _ref_forward(x, lengths, params)[:, :t_max]

    # run the hardware-selected path plus both explicit layouts (both are valid
    # on any TPU generation; "fused" targets 1-TC chips, "split" 2-TC chips).
    for mode in ("auto", "fused", "split"):
        y = bilstm_forward(x, lengths, params,
                           force_mode=None if mode == "auto" else mode)
        y = jax.block_until_ready(y[:, :t_max])
        assert y.shape == (B, t_max, 2 * HISIZE)
        err = float(jnp.max(jnp.abs(y - y_ref)))
        assert jnp.allclose(y, y_ref, atol=2.5e-2, rtol=2.5e-2), \
            f"{mode}: mismatch vs reference: {err}"
        # packed-sequence semantics: positions past each length are exactly zero
        assert float(jnp.abs(y[1, 5:]).max()) == 0.0, mode

    print("KERNEL_OK")
</pallas_src>

<mosaic_0001>
module attributes {stable_mosaic.version = 11 : i64} {
  func.func @_proj_kernel(%arg0: i32, %arg1: i32, %arg2: memref<64x32xbf16, #tpu.memory_space<vmem>>, %arg3: memref<32x1024xbf16, #tpu.memory_space<vmem>>, %arg4: memref<64x1024xbf16, #tpu.memory_space<vmem>>) attributes {dimension_semantics = [#tpu.dimension_semantics<parallel>, #tpu.dimension_semantics<parallel>], iteration_bounds = array<i64: 1, 1>, scalar_prefetch = 0 : i64, scratch_operands = 0 : i64, tpu.core_type = #tpu.core_type<tc>, window_params = [{transform_indices = @transform_0, window_bounds = array<i64: 64, 32>}, {transform_indices = @transform_1, window_bounds = array<i64: 32, 1024>}, {transform_indices = @transform_2, window_bounds = array<i64: 64, 1024>}]} {
    %c0 = arith.constant 0 : index
    %c0_0 = arith.constant 0 : index
    %0 = vector.load %arg2[%c0, %c0_0] : memref<64x32xbf16, #tpu.memory_space<vmem>>, vector<64x32xbf16>
    %c0_1 = arith.constant 0 : index
    %c0_2 = arith.constant 0 : index
    %1 = vector.load %arg3[%c0_1, %c0_2] : memref<32x1024xbf16, #tpu.memory_space<vmem>>, vector<32x1024xbf16>
    %cst = arith.constant dense<0.000000e+00> : vector<64x1024xf32>
    %2 = tpu.matmul %0, %1, %cst {dimension_numbers = #tpu.dot_dimension_numbers<[1], [0], [0], [1], [0, 0, 1, 1], [], []>} : vector<64x32xbf16>, vector<32x1024xbf16>, vector<64x1024xf32> -> vector<64x1024xf32>
    %3 = arith.truncf %2 : vector<64x1024xf32> to vector<64x1024xbf16>
    %c0_3 = arith.constant 0 : index
    %c0_4 = arith.constant 0 : index
    %4 = vector.load %arg4[%c0_3, %c0_4] : memref<64x1024xbf16, #tpu.memory_space<vmem>>, vector<64x1024xbf16>
    tpu.vector_store %arg4[%c0_3, %c0_4], %3 {strides = array<i32>} : memref<64x1024xbf16, #tpu.memory_space<vmem>>, vector<64x1024xbf16>,
    return
  }
  func.func @transform_0(%arg0: i32, %arg1: i32) -> (i32, i32) {
    %c0_i32 = arith.constant 0 : i32
    %c0_i32_0 = arith.constant 0 : i32
    return %arg1, %c0_i32 : i32, i32
  }
  func.func @transform_1(%arg0: i32, %arg1: i32) -> (i32, i32) {
    %c0_i32 = arith.constant 0 : i32
    %c0_i32_0 = arith.constant 0 : i32
    return %c0_i32, %arg0 : i32, i32
  }
  func.func @transform_2(%arg0: i32, %arg1: i32) -> (i32, i32) {
    %c0_i32 = arith.constant 0 : i32
    return %arg1, %arg0 : i32, i32
  }
}

</mosaic_0001>

<llo_original>
// kernel: tpu_custom_call.1
$region0: #{tpu_custom_call.1}
  #allocation0 [shape = 'u32[]', space=smem, size = 0x4, offset = 0x4, fixed_abs, tag = 'smem constant byte address 0x4 - core index']
  #allocation1 [shape = 'u32[144,128]{1,0:T(1,128)}', space=vmem, size = 0x12000, scoped, tag = 'internal scratch']
  %s0 = inlined_call_operand.vmem [shape: bf16[64,32], index: 0, kind: input, shape index: {}]
  %s1 = inlined_call_operand.hbm [shape: bf16[32,1024], index: 1, kind: input, shape index: {}]
  %s2 = inlined_call_operand.hbm [shape: bf16[64,1024], index: 2, kind: output, shape index: {}]
  %s3 = sld [smem:[#allocation0]]
  $region22: #{tpu_custom_call.1} parent=0
    _
  %s5 = ssub.s32 1, %s3
  %s6 = scalar_select 0, %s5, %s3
  $region1: #{tpu_custom_call.1} parent=0
    #allocation2 [shape = 'u8[65536]{0}', space=vmem, size = 0x10000, scoped, tag = 'input window, operand 1, single buffered']
    #allocation3 [shape = 's32[1]{0}', space=sflag, size = 0x4, scoped, tag = 'scoped memory for tpu_custom_call.1']
    #allocation4 [shape = 's32[1]{0}', space=sflag, size = 0x4, scoped, tag = 'scoped memory for tpu_custom_call.1']
    #allocation5 [shape = 'u8[131072]{0}', space=vmem, size = 0x20000, scoped, tag = 'output window, operand 0, single buffered']
    %7 = vsyncpa [#allocation3], 0
    %8 = vsyncpa [#allocation4], 0
    // Predicated region
    $region2: #{tpu_custom_call.1} parent=1 // pred_check
      _
    $region3: #{tpu_custom_call.1} parent=1 // pred_check_branch
      %10 = sbr.rel (0) target = $region5
    $region4: #{tpu_custom_call.1} parent=1 // pred_region
      _
    $region5: #{tpu_custom_call.1} parent=1 // pred_fallthru
      _
    // Predicated region
    $region6: #{tpu_custom_call.1} parent=1 // pred_check
      _
    $region7: #{tpu_custom_call.1} parent=1 // pred_check_branch
      %12 = sbr.rel (0) target = $region9
    $region8: #{tpu_custom_call.1} parent=1 // pred_region
      %s14 = ssub.s32 2048, 2048
      %15 = vsyncadd [#allocation3], %s14
      %s16 = sshll.u32 [#allocation2], 4
      %s17 = int_to_ptr.vmem [resolvable:$true] %s16
      %22 = dma.hbm_to_vmem [thread:$0]  %s1, 2048, %s17, [#allocation3], 512, 512, 32
    $region9: #{tpu_custom_call.1} parent=1 // pred_fallthru
      _
    // Predicated region
    $region10: #{tpu_custom_call.1} parent=1 // pred_check
      _
    $region11: #{tpu_custom_call.1} parent=1 // pred_check_branch
      %24 = sbr.rel (0) target = $region13
    $region12: #{tpu_custom_call.1} parent=1 // pred_region
      %25 = dma.done [#allocation3], 2048
    $region13: #{tpu_custom_call.1} parent=1 // pred_fallthru
      _
    %v27 = vld [vmem:[%s0] sm:$0xf]
    %v28 = vld [vmem:[%s0 + $0x4] sm:$0xf]
    %v29 = vld [vmem:[%s0 + $0x8] sm:$0xf]
    %v30 = vld [vmem:[%s0 + $0xc] sm:$0xf]
    %v31 = vld [vmem:[%s0 + $0x10] sm:$0xf]
    %v32 = vld [vmem:[%s0 + $0x14] sm:$0xf]
    %v33 = vld [vmem:[%s0 + $0x18] sm:$0xf]
    %v34 = vld [vmem:[%s0 + $0x1c] sm:$0xf]
    %v35 = vld [vmem:[#allocation2] sm:$0xff]
    %v36 = vld [vmem:[#allocation2 + $0x8] sm:$0xff]
    %v37 = vld [vmem:[#allocation2 + $0x10] sm:$0xff]
    %v38 = vld [vmem:[#allocation2 + $0x18] sm:$0xff]
    %v39 = vld [vmem:[#allocation2 + $0x20] sm:$0xff]
    %v40 = vld [vmem:[#allocation2 + $0x28] sm:$0xff]
    %v41 = vld [vmem:[#allocation2 + $0x30] sm:$0xff]
    %v42 = vld [vmem:[#allocation2 + $0x38] sm:$0xff]
    %v43 = vld [vmem:[#allocation2 + $0x40] sm:$0xff]
    %v44 = vld [vmem:[#allocation2 + $0x48] sm:$0xff]
    %v45 = vld [vmem:[#allocation2 + $0x50] sm:$0xff]
    %v46 = vld [vmem:[#allocation2 + $0x58] sm:$0xff]
    %v47 = vld [vmem:[#allocation2 + $0x60] sm:$0xff]
    %v48 = vld [vmem:[#allocation2 + $0x68] sm:$0xff]
    %v49 = vld [vmem:[#allocation2 + $0x70] sm:$0xff]
    %v50 = vld [vmem:[#allocation2 + $0x78] sm:$0xff]
    %v59 = vunpack.c.l.b16 %v27
    %v60 = vunpack.c.l.b16 %v28
    %v61 = vunpack.c.l.b16 %v29
    %v62 = vunpack.c.l.b16 %v30
    %v63 = vunpack.c.l.b16 %v31
    %v64 = vunpack.c.l.b16 %v32
    %v65 = vunpack.c.l.b16 %v33
    %v66 = vunpack.c.l.b16 %v34
    %v67 = vpack.c.b16 %v60, %v59
    %v68 = vpack.c.b16 %v62, %v61
    %v69 = vpack.c.b16 %v64, %v63
    %v70 = vpack.c.b16 %v66, %v65
    %v87 = vunpack.c.l.b16 %v35
    %v88 = vunpack.c.h.b16 %v35
    %v89 = vunpack.c.l.b16 %v36
    %v90 = vunpack.c.h.b16 %v36
    %v91 = vunpack.c.l.b16 %v37
    %v92 = vunpack.c.h.b16 %v37
    %v93 = vunpack.c.l.b16 %v38
    %v94 = vunpack.c.h.b16 %v38
    %v95 = vunpack.c.l.b16 %v39
    %v96 = vunpack.c.h.b16 %v39
    %v97 = vunpack.c.l.b16 %v40
    %v98 = vunpack.c.h.b16 %v40
    %v99 = vunpack.c.l.b16 %v41
    %v100 = vunpack.c.h.b16 %v41
    %v101 = vunpack.c.l.b16 %v42
    %v102 = vunpack.c.h.b16 %v42
    %v103 = vunpack.c.l.b16 %v43
    %v104 = vunpack.c.h.b16 %v43
    %v105 = vunpack.c.l.b16 %v44
    %v106 = vunpack.c.h.b16 %v44
    %v107 = vunpack.c.l.b16 %v45
    %v108 = vunpack.c.h.b16 %v45
    %v109 = vunpack.c.l.b16 %v46
    %v110 = vunpack.c.h.b16 %v46
    %v111 = vunpack.c.l.b16 %v47
    %v112 = vunpack.c.h.b16 %v47
    %v113 = vunpack.c.l.b16 %v48
    %v114 = vunpack.c.h.b16 %v48
    %v115 = vunpack.c.l.b16 %v49
    %v116 = vunpack.c.h.b16 %v49
    %v117 = vunpack.c.l.b16 %v50
    %v118 = vunpack.c.h.b16 %v50
    %v119 = vpack.c.b16 %v95, %v87
    %v120 = vpack.c.b16 %v96, %v88
    %v121 = vpack.c.b16 %v97, %v89
    %v122 = vpack.c.b16 %v98, %v90
    %v123 = vpack.c.b16 %v99, %v91
    %v124 = vpack.c.b16 %v100, %v92
    %v125 = vpack.c.b16 %v101, %v93
    %v126 = vpack.c.b16 %v102, %v94
    %v127 = vpack.c.b16 %v111, %v103
    %v128 = vpack.c.b16 %v112, %v104
    %v129 = vpack.c.b16 %v113, %v105
    %v130 = vpack.c.b16 %v114, %v106
    %v131 = vpack.c.b16 %v115, %v107
    %v132 = vpack.c.b16 %v116, %v108
    %v133 = vpack.c.b16 %v117, %v109
    %v134 = vpack.c.b16 %v118, %v110
    %vm151 = vcmask 261120
    %v153 = vsel %vm151, %v67, 0
    %v156 = vsel %vm151, %v68, 0
    %v159 = vsel %vm151, %v69, 0
    %v162 = vsel %vm151, %v70, 0
    %164 = vmatprep.subr.bf16.mxu0 0
    %165 = vmatpush1.bf16.msra.mxu0 0
    %166 = vmatprep.subr.bf16.mxu0 0
    %167 = vmatpush1.bf16.msra.mxu0 0
    %168 = vmatprep.subr.bf16.mxu0 0
    %169 = vmatpush1.bf16.msra.mxu0 0
    %170 = vmatprep.subr.bf16.mxu0 0
    %171 = vmatpush1.bf16.msra.mxu0 0
    %172 = vmatprep.subr.bf16.mxu0 0
    %173 = vmatpush1.bf16.msra.mxu0 0
    %174 = vmatprep.subr.bf16.mxu0 0
    %175 = vmatpush1.bf16.msra.mxu0 0
    %176 = vmatprep.subr.bf16.mxu0 %v128
    %177 = vmatpush1.bf16.msra.mxu0 %v127
    %178 = vmatprep.subr.bf16.mxu0 %v120
    %179 = vmatpush1.bf16.msra.mxu0 %v119
    %180 = vmatprep.subr.bf16.mxu0 0
    %181 = vmatpush2.bf16.msra.mxu0 0
    %182 = vmatprep.subr.bf16.mxu0 0
    %183 = vmatpush2.bf16.msra.mxu0 0
    %184 = vmatprep.subr.bf16.mxu0 0
    %185 = vmatpush2.bf16.msra.mxu0 0
    %186 = vmatprep.subr.bf16.mxu0 0
    %187 = vmatpush2.bf16.msra.mxu0 0
    %188 = vmatprep.subr.bf16.mxu0 0
    %189 = vmatpush2.bf16.msra.mxu0 0
    %190 = vmatprep.subr.bf16.mxu0 0
    %191 = vmatpush2.bf16.msra.mxu0 0
    %192 = vmatprep.subr.bf16.mxu0 0
    %193 = vmatpush2.bf16.msra.mxu0 0
    %194 = vmatprep.subr.bf16.mxu0 0
    %195 = vmatpush2.bf16.msra.mxu0 0
    %196 = vmatprep.mubr.bf16.mxu0 0
    %197 = vmatmul.mubr.bf16.gmra.mxu0 %v153
    %v198 = vpop.f32.mrf.mxu0
    %v199 = vadd.f32 0.0, %v198
    %v200 = vpop.f32.mrf.mxu0
    %v201 = vadd.f32 0.0, %v200
    %v202 = vpop.f32.mrf.mxu0
    %v203 = vadd.f32 0.0, %v202
    %v204 = vpop.f32.mrf.mxu0
    %v205 = vadd.f32 0.0, %v204
    %206 = vmatprep.mubr.bf16.mxu0 0
    %207 = vmatmul.mubr.bf16.gmra.mxu0 %v156
    %v208 = vpop.f32.mrf.mxu0
    %v209 = vadd.f32 0.0, %v208
    %v210 = vpop.f32.mrf.mxu0
    %v211 = vadd.f32 0.0, %v210
    %v212 = vpop.f32.mrf.mxu0
    %v213 = vadd.f32 0.0, %v212
    %v214 = vpop.f32.mrf.mxu0
    %v215 = vadd.f32 0.0, %v214
    %216 = vmatprep.mubr.bf16.mxu0 0
    %217 = vmatmul.mubr.bf16.gmra.mxu0 %v159
    %v218 = vpop.f32.mrf.mxu0
    %v219 = vadd.f32 0.0, %v218
    %v220 = vpop.f32.mrf.mxu0
    %v221 = vadd.f32 0.0, %v220
    %v222 = vpop.f32.mrf.mxu0
    %v223 = vadd.f32 0.0, %v222
    %v224 = vpop.f32.mrf.mxu0
    %v225 = vadd.f32 0.0, %v224
    %226 = vmatprep.mubr.bf16.mxu0 0
    %227 = vmatmul.mubr.bf16.gmra.mxu0 %v162
    %v228 = vpop.f32.mrf.mxu0
    %v229 = vadd.f32 0.0, %v228
    %v230 = vpop.f32.mrf.mxu0
    %v231 = vadd.f32 0.0, %v230
    %v232 = vpop.f32.mrf.mxu0
    %v233 = vadd.f32 0.0, %v232
    %v234 = vpop.f32.mrf.mxu0
    %v235 = vadd.f32 0.0, %v234
    %236 = vdwg.mxu0
    %237 = vmatprep.subr.bf16.mxu0 0
    %238 = vmatpush1.bf16.msra.mxu0 0
    %239 = vmatprep.subr.bf16.mxu0 0
    %240 = vmatpush1.bf16.msra.mxu0 0
    %241 = vmatprep.subr.bf16.mxu0 0
    %242 = vmatpush1.bf16.msra.mxu0 0
    %243 = vmatprep.subr.bf16.mxu0 0
    %244 = vmatpush1.bf16.msra.mxu0 0
    %245 = vmatprep.subr.bf16.mxu0 0
    %246 = vmatpush1.bf16.msra.mxu0 0
    %247 = vmatprep.subr.bf16.mxu0 0
    %248 = vmatpush1.bf16.msra.mxu0 0
    %249 = vmatprep.subr.bf16.mxu0 %v130
    %250 = vmatpush1.bf16.msra.mxu0 %v129
    %251 = vmatprep.subr.bf16.mxu0 %v122
    %252 = vmatpush1.bf16.msra.mxu0 %v121
    %253 = vmatprep.subr.bf16.mxu0 0
    %254 = vmatpush2.bf16.msra.mxu0 0
    %255 = vmatprep.subr.bf16.mxu0 0
    %256 = vmatpush2.bf16.msra.mxu0 0
    %257 = vmatprep.subr.bf16.mxu0 0
    %258 = vmatpush2.bf16.msra.mxu0 0
    %259 = vmatprep.subr.bf16.mxu0 0
    %260 = vmatpush2.bf16.msra.mxu0 0
    %261 = vmatprep.subr.bf16.mxu0 0
    %262 = vmatpush2.bf16.msra.mxu0 0
    %263 = vmatprep.subr.bf16.mxu0 0
    %264 = vmatpush2.bf16.msra.mxu0 0
    %265 = vmatprep.subr.bf16.mxu0 0
    %266 = vmatpush2.bf16.msra.mxu0 0
    %267 = vmatprep.subr.bf16.mxu0 0
    %268 = vmatpush2.bf16.msra.mxu0 0
    %269 = vmatprep.mubr.bf16.mxu0 0
    %270 = vmatmul.mubr.bf16.gmra.mxu0 %v153
    %v271 = vpop.f32.mrf.mxu0
    %v272 = vadd.f32 0.0, %v271
    %v273 = vpop.f32.mrf.mxu0
    %v274 = vadd.f32 0.0, %v273
    %v275 = vpop.f32.mrf.mxu0
    %v276 = vadd.f32 0.0, %v275
    %v277 = vpop.f32.mrf.mxu0
    %v278 = vadd.f32 0.0, %v277
    %279 = vmatprep.mubr.bf16.mxu0 0
    %280 = vmatmul.mubr.bf16.gmra.mxu0 %v156
    %v281 = vpop.f32.mrf.mxu0
    %v282 = vadd.f32 0.0, %v281
    %v283 = vpop.f32.mrf.mxu0
    %v284 = vadd.f32 0.0, %v283
    %v285 = vpop.f32.mrf.mxu0
    %v286 = vadd.f32 0.0, %v285
    %v287 = vpop.f32.mrf.mxu0
    %v288 = vadd.f32 0.0, %v287
    %289 = vmatprep.mubr.bf16.mxu0 0
    %290 = vmatmul.mubr.bf16.gmra.mxu0 %v159
    %v291 = vpop.f32.mrf.mxu0
    %v292 = vadd.f32 0.0, %v291
    %v293 = vpop.f32.mrf.mxu0
    %v294 = vadd.f32 0.0, %v293
    %v295 = vpop.f32.mrf.mxu0
    %v296 = vadd.f32 0.0, %v295
    %v297 = vpop.f32.mrf.mxu0
    %v298 = vadd.f32 0.0, %v297
    %299 = vmatprep.mubr.bf16.mxu0 0
    %300 = vmatmul.mubr.bf16.gmra.mxu0 %v162
    %v301 = vpop.f32.mrf.mxu0
    %v302 = vadd.f32 0.0, %v301
    %v303 = vpop.f32.mrf.mxu0
    %v304 = vadd.f32 0.0, %v303
    %v305 = vpop.f32.mrf.mxu0
    %v306 = vadd.f32 0.0, %v305
    %v307 = vpop.f32.mrf.mxu0
    %v308 = vadd.f32 0.0, %v307
    %309 = vdwg.mxu0
    %310 = vmatprep.subr.bf16.mxu0 0
    %311 = vmatpush1.bf16.msra.mxu0 0
    %312 = vmatprep.subr.bf16.mxu0 0
    %313 = vmatpush1.bf16.msra.mxu0 0
    %314 = vmatprep.subr.bf16.mxu0 0
    %315 = vmatpush1.bf16.msra.mxu0 0
    %316 = vmatprep.subr.bf16.mxu0 0
    %317 = vmatpush1.bf16.msra.mxu0 0
    %318 = vmatprep.subr.bf16.mxu0 0
    %319 = vmatpush1.bf16.msra.mxu0 0
    %320 = vmatprep.subr.bf16.mxu0 0
    %321 = vmatpush1.bf16.msra.mxu0 0
    %322 = vmatprep.subr.bf16.mxu0 %v132
    %323 = vmatpush1.bf16.msra.mxu0 %v131
    %324 = vmatprep.subr.bf16.mxu0 %v124
    %325 = vmatpush1.bf16.msra.mxu0 %v123
    %326 = vmatprep.subr.bf16.mxu0 0
    %327 = vmatpush2.bf16.msra.mxu0 0
    %328 = vmatprep.subr.bf16.mxu0 0
    %329 = vmatpush2.bf16.msra.mxu0 0
    %330 = vmatprep.subr.bf16.mxu0 0
    %331 = vmatpush2.bf16.msra.mxu0 0
    %332 = vmatprep.subr.bf16.mxu0 0
    %333 = vmatpush2.bf16.msra.mxu0 0
    %334 = vmatprep.subr.bf16.mxu0 0
    %335 = vmatpush2.bf16.msra.mxu0 0
    %336 = vmatprep.subr.bf16.mxu0 0
    %337 = vmatpush2.bf16.msra.mxu0 0
    %338 = vmatprep.subr.bf16.mxu0 0
    %339 = vmatpush2.bf16.msra.mxu0 0
    %340 = vmatprep.subr.bf16.mxu0 0
    %341 = vmatpush2.bf16.msra.mxu0 0
    %342 = vmatprep.mubr.bf16.mxu0 0
    %343 = vmatmul.mubr.bf16.gmra.mxu0 %v153
    %v344 = vpop.f32.mrf.mxu0
    %v345 = vadd.f32 0.0, %v344
    %v346 = vpop.f32.mrf.mxu0
    %v347 = vadd.f32 0.0, %v346
    %v348 = vpop.f32.mrf.mxu0
    %v349 = vadd.f32 0.0, %v348
    %v350 = vpop.f32.mrf.mxu0
    %v351 = vadd.f32 0.0, %v350
    %352 = vmatprep.mubr.bf16.mxu0 0
    %353 = vmatmul.mubr.bf16.gmra.mxu0 %v156
    %v354 = vpop.f32.mrf.mxu0
    %v355 = vadd.f32 0.0, %v354
    %v356 = vpop.f32.mrf.mxu0
    %v357 = vadd.f32 0.0, %v356
    %v358 = vpop.f32.mrf.mxu0
    %v359 = vadd.f32 0.0, %v358
    %v360 = vpop.f32.mrf.mxu0
    %v361 = vadd.f32 0.0, %v360
    %362 = vmatprep.mubr.bf16.mxu0 0
    %363 = vmatmul.mubr.bf16.gmra.mxu0 %v159
    %v364 = vpop.f32.mrf.mxu0
    %v365 = vadd.f32 0.0, %v364
    %v366 = vpop.f32.mrf.mxu0
    %v367 = vadd.f32 0.0, %v366
    %v368 = vpop.f32.mrf.mxu0
    %v369 = vadd.f32 0.0, %v368
    %v370 = vpop.f32.mrf.mxu0
    %v371 = vadd.f32 0.0, %v370
    %372 = vmatprep.mubr.bf16.mxu0 0
    %373 = vmatmul.mubr.bf16.gmra.mxu0 %v162
    %v374 = vpop.f32.mrf.mxu0
    %v375 = vadd.f32 0.0, %v374
    %v376 = vpop.f32.mrf.mxu0
    %v377 = vadd.f32 0.0, %v376
    %v378 = vpop.f32.mrf.mxu0
    %v379 = vadd.f32 0.0, %v378
    %v380 = vpop.f32.mrf.mxu0
    %v381 = vadd.f32 0.0, %v380
    %382 = vdwg.mxu0
    %383 = vmatprep.subr.bf16.mxu0 0
    %384 = vmatpush1.bf16.msra.mxu0 0
    %385 = vmatprep.subr.bf16.mxu0 0
    %386 = vmatpush1.bf16.msra.mxu0 0
    %387 = vmatprep.subr.bf16.mxu0 0
    %388 = vmatpush1.bf16.msra.mxu0 0
    %389 = vmatprep.subr.bf16.mxu0 0
    %390 = vmatpush1.bf16.msra.mxu0 0
    %391 = vmatprep.subr.bf16.mxu0 0
    %392 = vmatpush1.bf16.msra.mxu0 0
    %393 = vmatprep.subr.bf16.mxu0 0
    %394 = vmatpush1.bf16.msra.mxu0 0
    %395 = vmatprep.subr.bf16.mxu0 %v134
    %396 = vmatpush1.bf16.msra.mxu0 %v133
    %397 = vmatprep.subr.bf16.mxu0 %v126
    %398 = vmatpush1.bf16.msra.mxu0 %v125
    %399 = vmatprep.subr.bf16.mxu0 0
    %400 = vmatpush2.bf16.msra.mxu0 0
    %401 = vmatprep.subr.bf16.mxu0 0
    %402 = vmatpush2.bf16.msra.mxu0 0
    %403 = vmatprep.subr.bf16.mxu0 0
    %404 = vmatpush2.bf16.msra.mxu0 0
    %405 = vmatprep.subr.bf16.mxu0 0
    %406 = vmatpush2.bf16.msra.mxu0 0
    %407 = vmatprep.subr.bf16.mxu0 0
    %408 = vmatpush2.bf16.msra.mxu0 0
    %409 = vmatprep.subr.bf16.mxu0 0
    %410 = vmatpush2.bf16.msra.mxu0 0
    %411 = vmatprep.subr.bf16.mxu0 0
    %412 = vmatpush2.bf16.msra.mxu0 0
    %413 = vmatprep.subr.bf16.mxu0 0
    %414 = vmatpush2.bf16.msra.mxu0 0
    %415 = vmatprep.mubr.bf16.mxu0 0
    %416 = vmatmul.mubr.bf16.gmra.mxu0 %v153
    %v417 = vpop.f32.mrf.mxu0
    %v418 = vadd.f32 0.0, %v417
    %v419 = vpop.f32.mrf.mxu0
    %v420 = vadd.f32 0.0, %v419
    %v421 = vpop.f32.mrf.mxu0
    %v422 = vadd.f32 0.0, %v421
    %v423 = vpop.f32.mrf.mxu0
    %v424 = vadd.f32 0.0, %v423
    %425 = vmatprep.mubr.bf16.mxu0 0
    %426 = vmatmul.mubr.bf16.gmra.mxu0 %v156
    %v427 = vpop.f32.mrf.mxu0
    %v428 = vadd.f32 0.0, %v427
    %v429 = vpop.f32.mrf.mxu0
    %v430 = vadd.f32 0.0, %v429
    %v431 = vpop.f32.mrf.mxu0
    %v432 = vadd.f32 0.0, %v431
    %v433 = vpop.f32.mrf.mxu0
    %v434 = vadd.f32 0.0, %v433
    %435 = vmatprep.mubr.bf16.mxu0 0
    %436 = vmatmul.mubr.bf16.gmra.mxu0 %v159
    %v437 = vpop.f32.mrf.mxu0
    %v438 = vadd.f32 0.0, %v437
    %v439 = vpop.f32.mrf.mxu0
    %v440 = vadd.f32 0.0, %v439
    %v441 = vpop.f32.mrf.mxu0
    %v442 = vadd.f32 0.0, %v441
    %v443 = vpop.f32.mrf.mxu0
    %v444 = vadd.f32 0.0, %v443
    %445 = vmatprep.mubr.bf16.mxu0 0
    %446 = vmatmul.mubr.bf16.gmra.mxu0 %v162
    %v447 = vpop.f32.mrf.mxu0
    %v448 = vadd.f32 0.0, %v447
    %v449 = vpop.f32.mrf.mxu0
    %v450 = vadd.f32 0.0, %v449
    %v451 = vpop.f32.mrf.mxu0
    %v452 = vadd.f32 0.0, %v451
    %v453 = vpop.f32.mrf.mxu0
    %v454 = vadd.f32 0.0, %v453
    %455 = vdwg.mxu0
    %v456 = vpack.c.bf16 %v203, %v199
    %v457 = vpack.c.bf16 %v205, %v201
    %v458 = vpack.c.bf16 %v276, %v272
    %v459 = vpack.c.bf16 %v278, %v274
    %v460 = vpack.c.bf16 %v349, %v345
    %v461 = vpack.c.bf16 %v351, %v347
    %v462 = vpack.c.bf16 %v422, %v418
    %v463 = vpack.c.bf16 %v424, %v420
    %v464 = vpack.c.bf16 %v213, %v209
    %v465 = vpack.c.bf16 %v215, %v211
    %v466 = vpack.c.bf16 %v286, %v282
    %v467 = vpack.c.bf16 %v288, %v284
    %v468 = vpack.c.bf16 %v359, %v355
    %v469 = vpack.c.bf16 %v361, %v357
    %v470 = vpack.c.bf16 %v432, %v428
    %v471 = vpack.c.bf16 %v434, %v430
    %v472 = vpack.c.bf16 %v223, %v219
    %v473 = vpack.c.bf16 %v225, %v221
    %v474 = vpack.c.bf16 %v296, %v292
    %v475 = vpack.c.bf16 %v298, %v294
    %v476 = vpack.c.bf16 %v369, %v365
    %v477 = vpack.c.bf16 %v371, %v367
    %v478 = vpack.c.bf16 %v442, %v438
    %v479 = vpack.c.bf16 %v444, %v440
    %v480 = vpack.c.bf16 %v233, %v229
    %v481 = vpack.c.bf16 %v235, %v231
    %v482 = vpack.c.bf16 %v306, %v302
    %v483 = vpack.c.bf16 %v308, %v304
    %v484 = vpack.c.bf16 %v379, %v375
    %v485 = vpack.c.bf16 %v381, %v377
    %v486 = vpack.c.bf16 %v452, %v448
    %v487 = vpack.c.bf16 %v454, %v450
    %v520 = vunpack.c.l.b16 %v456
    %v521 = vunpack.c.l.b16 %v457
    %v522 = vunpack.c.l.b16 %v458
    %v523 = vunpack.c.l.b16 %v459
    %v524 = vunpack.c.l.b16 %v460
    %v525 = vunpack.c.l.b16 %v461
    %v526 = vunpack.c.l.b16 %v462
    %v527 = vunpack.c.l.b16 %v463
    %v528 = vunpack.c.h.b16 %v456
    %v529 = vunpack.c.h.b16 %v457
    %v530 = vunpack.c.h.b16 %v458
    %v531 = vunpack.c.h.b16 %v459
    %v532 = vunpack.c.h.b16 %v460
    %v533 = vunpack.c.h.b16 %v461
    %v534 = vunpack.c.h.b16 %v462
    %v535 = vunpack.c.h.b16 %v463
    %v536 = vunpack.c.l.b16 %v464
    %v537 = vunpack.c.l.b16 %v465
    %v538 = vunpack.c.l.b16 %v466
    %v539 = vunpack.c.l.b16 %v467
    %v540 = vunpack.c.l.b16 %v468
    %v541 = vunpack.c.l.b16 %v469
    %v542 = vunpack.c.l.b16 %v470
    %v543 = vunpack.c.l.b16 %v471
    %v544 = vunpack.c.h.b16 %v464
    %v545 = vunpack.c.h.b16 %v465
    %v546 = vunpack.c.h.b16 %v466
    %v547 = vunpack.c.h.b16 %v467
    %v548 = vunpack.c.h.b16 %v468
    %v549 = vunpack.c.h.b16 %v469
    %v550 = vunpack.c.h.b16 %v470
    %v551 = vunpack.c.h.b16 %v471
    %v552 = vunpack.c.l.b16 %v472
    %v553 = vunpack.c.l.b16 %v473
    %v554 = vunpack.c.l.b16 %v474
    %v555 = vunpack.c.l.b16 %v475
    %v556 = vunpack.c.l.b16 %v476
    %v557 = vunpack.c.l.b16 %v477
    %v558 = vunpack.c.l.b16 %v478
    %v559 = vunpack.c.l.b16 %v479
    %v560 = vunpack.c.h.b16 %v472
    %v561 = vunpack.c.h.b16 %v473
    %v562 = vunpack.c.h.b16 %v474
    %v563 = vunpack.c.h.b16 %v475
    %v564 = vunpack.c.h.b16 %v476
    %v565 = vunpack.c.h.b16 %v477
    %v566 = vunpack.c.h.b16 %v478
    %v567 = vunpack.c.h.b16 %v479
    %v568 = vunpack.c.l.b16 %v480
    %v569 = vunpack.c.l.b16 %v481
    %v570 = vunpack.c.l.b16 %v482
    %v571 = vunpack.c.l.b16 %v483
    %v572 = vunpack.c.l.b16 %v484
    %v573 = vunpack.c.l.b16 %v485
    %v574 = vunpack.c.l.b16 %v486
    %v575 = vunpack.c.l.b16 %v487
    %v576 = vunpack.c.h.b16 %v480
    %v577 = vunpack.c.h.b16 %v481
    %v578 = vunpack.c.h.b16 %v482
    %v579 = vunpack.c.h.b16 %v483
    %v580 = vunpack.c.h.b16 %v484
    %v581 = vunpack.c.h.b16 %v485
    %v582 = vunpack.c.h.b16 %v486
    %v583 = vunpack.c.h.b16 %v487
    %v584 = vpack.c.b16 %v521, %v520
    %v585 = vpack.c.b16 %v523, %v522
    %v586 = vpack.c.b16 %v525, %v524
    %v587 = vpack.c.b16 %v527, %v526
    %v588 = vpack.c.b16 %v529, %v528
    %v589 = vpack.c.b16 %v531, %v530
    %v590 = vpack.c.b16 %v533, %v532
    %v591 = vpack.c.b16 %v535, %v534
    %v592 = vpack.c.b16 %v537, %v536
    %v593 = vpack.c.b16 %v539, %v538
    %v594 = vpack.c.b16 %v541, %v540
    %v595 = vpack.c.b16 %v543, %v542
    %v596 = vpack.c.b16 %v545, %v544
    %v597 = vpack.c.b16 %v547, %v546
    %v598 = vpack.c.b16 %v549, %v548
    %v599 = vpack.c.b16 %v551, %v550
    %v600 = vpack.c.b16 %v553, %v552
    %v601 = vpack.c.b16 %v555, %v554
    %v602 = vpack.c.b16 %v557, %v556
    %v603 = vpack.c.b16 %v559, %v558
    %v604 = vpack.c.b16 %v561, %v560
    %v605 = vpack.c.b16 %v563, %v562
    %v606 = vpack.c.b16 %v565, %v564
    %v607 = vpack.c.b16 %v567, %v566
    %v608 = vpack.c.b16 %v569, %v568
    %v609 = vpack.c.b16 %v571, %v570
    %v610 = vpack.c.b16 %v573, %v572
    %v611 = vpack.c.b16 %v575, %v574
    %v612 = vpack.c.b16 %v577, %v576
    %v613 = vpack.c.b16 %v579, %v578
    %v614 = vpack.c.b16 %v581, %v580
    %v615 = vpack.c.b16 %v583, %v582
    %648 = vst [vmem:[#allocation5] sm:$0xff] %v584
    %649 = vst [vmem:[#allocation5 + $0x8] sm:$0xff] %v585
    %650 = vst [vmem:[#allocation5 + $0x10] sm:$0xff] %v586
    %651 = vst [vmem:[#allocation5 + $0x18] sm:$0xff] %v587
    %652 = vst [vmem:[#allocation5 + $0x20] sm:$0xff] %v588
    %653 = vst [vmem:[#allocation5 + $0x28] sm:$0xff] %v589
    %654 = vst [vmem:[#allocation5 + $0x30] sm:$0xff] %v590
    %655 = vst [vmem:[#allocation5 + $0x38] sm:$0xff] %v591
    %656 = vst [vmem:[#allocation5 + $0x40] sm:$0xff] %v592
    %657 = vst [vmem:[#allocation5 + $0x48] sm:$0xff] %v593
    %658 = vst [vmem:[#allocation5 + $0x50] sm:$0xff] %v594
    %659 = vst [vmem:[#allocation5 + $0x58] sm:$0xff] %v595
    %660 = vst [vmem:[#allocation5 + $0x60] sm:$0xff] %v596
    %661 = vst [vmem:[#allocation5 + $0x68] sm:$0xff] %v597
    %662 = vst [vmem:[#allocation5 + $0x70] sm:$0xff] %v598
    %663 = vst [vmem:[#allocation5 + $0x78] sm:$0xff] %v599
    %664 = vst [vmem:[#allocation5 + $0x80] sm:$0xff] %v600
    %665 = vst [vmem:[#allocation5 + $0x88] sm:$0xff] %v601
    %666 = vst [vmem:[#allocation5 + $0x90] sm:$0xff] %v602
    %667 = vst [vmem:[#allocation5 + $0x98] sm:$0xff] %v603
    %668 = vst [vmem:[#allocation5 + $0xa0] sm:$0xff] %v604
    %669 = vst [vmem:[#allocation5 + $0xa8] sm:$0xff] %v605
    %670 = vst [vmem:[#allocation5 + $0xb0] sm:$0xff] %v606
    %671 = vst [vmem:[#allocation5 + $0xb8] sm:$0xff] %v607
    %672 = vst [vmem:[#allocation5 + $0xc0] sm:$0xff] %v608
    %673 = vst [vmem:[#allocation5 + $0xc8] sm:$0xff] %v609
    %674 = vst [vmem:[#allocation5 + $0xd0] sm:$0xff] %v610
    %675 = vst [vmem:[#allocation5 + $0xd8] sm:$0xff] %v611
    %676 = vst [vmem:[#allocation5 + $0xe0] sm:$0xff] %v612
    %677 = vst [vmem:[#allocation5 + $0xe8] sm:$0xff] %v613
    %678 = vst [vmem:[#allocation5 + $0xf0] sm:$0xff] %v614
    %679 = vst [vmem:[#allocation5 + $0xf8] sm:$0xff] %v615
    // Predicated region
    $region14: #{tpu_custom_call.1} parent=1 // pred_check
      _
    $region15: #{tpu_custom_call.1} parent=1 // pred_check_branch
      %681 = sbr.rel (0) target = $region17
    $region16: #{tpu_custom_call.1} parent=1 // pred_region
      %s683 = ssub.s32 4096, 4096
      %684 = vsyncadd [#allocation4], %s683
      %s685 = sshll.u32 [#allocation5], 4
      %s686 = int_to_ptr.vmem [resolvable:$true] %s685
      %691 = dma.vmem_to_hbm [thread:$0]  %s686, 4096, %s2, [#allocation4], 512, 512, 32
    $region17: #{tpu_custom_call.1} parent=1 // pred_fallthru
      _
    // Predicated region
    $region18: #{tpu_custom_call.1} parent=1 // pred_check
      _
    $region19: #{tpu_custom_call.1} parent=1 // pred_check_branch
      %693 = sbr.rel (0) target = $region21
    $region20: #{tpu_custom_call.1} parent=1 // pred_region
      %694 = dma.done [#allocation4], 4096
    $region21: #{tpu_custom_call.1} parent=1 // pred_fallthru
      _
    %695 = vsyncpa [#allocation3], 1
    %696 = vsyncpa [#allocation4], 1

</llo_original>
